<compile_context>
chip_gen: v7x
topology: tpu7x:2x2x1
jax: 0.10.0
libtpu: 0.0.40
codegen_flags: <defaults>
</compile_context>

<pallas_src>
import jax
import jax.numpy as jnp
from jax.experimental import pallas as pl
from jax.experimental.pallas import tpu as pltpu


def _round_up(n, m):
    return ((n + m - 1) // m) * m


def _pad2d(a, rows, cols):
    r, c = a.shape
    if r == rows and c == cols:
        return a
    return jnp.pad(a, ((0, rows - r), (0, cols - c)))


def _mlp3_kernel(x_ref, w1_ref, b1_ref, w2_ref, b2_ref, w3_ref, b3_ref, o_ref):
    """Fused Linear->ReLU->Linear->ReLU->Linear on one batch tile.

    Matmuls run on the MXU with bf16 operands / f32 accumulation; bias-add and
    ReLU epilogues run on the VPU in f32.  Intermediates never touch HBM.
    """
    x = x_ref[...].astype(jnp.bfloat16)                      # f32 -> bf16 in-kernel

    h = jnp.dot(x, w1_ref[...], preferred_element_type=jnp.float32)
    h = jnp.maximum(h + b1_ref[...], 0.0)                    # f32 epilogue

    h = jnp.dot(h.astype(jnp.bfloat16), w2_ref[...],
                preferred_element_type=jnp.float32)
    h = jnp.maximum(h + b2_ref[...], 0.0)

    y = jnp.dot(h.astype(jnp.bfloat16), w3_ref[...],
                preferred_element_type=jnp.float32)
    out_w = o_ref.shape[-1]
    y = y[:, :out_w] + b3_ref[...]                           # drop zero-padded cols
    o_ref[...] = y.astype(o_ref.dtype)


def fused_mlp3(x2d, params):
    """x2d: [B, In] f32; params: 3 x (w [in,out] f32, b [1,out] f32) -> [B, out] f32."""
    (w1, b1), (w2, b2), (w3, b3) = params
    B, In = x2d.shape
    H1 = w1.shape[1]
    H2 = w2.shape[1]
    Out = w3.shape[1]

    # Lane-dense padding for every MXU contraction / column dimension.
    In_p = _round_up(In, 128)
    H1_p = _round_up(H1, 128)
    H2_p = _round_up(H2, 128)
    Out_p = _round_up(Out, 128)

    # x stays f32 (cast to bf16 inside the kernel); pad only if needed.
    x_p = x2d if In == In_p else jnp.pad(x2d, ((0, 0), (0, In_p - In)))
    w1_p = _pad2d(w1, In_p, H1_p).astype(jnp.bfloat16)
    w2_p = _pad2d(w2, H1_p, H2_p).astype(jnp.bfloat16)
    w3_p = _pad2d(w3, H2_p, Out_p).astype(jnp.bfloat16)
    b1_p = _pad2d(b1, 1, H1_p)          # biases stay f32 (epilogue is f32)
    b2_p = _pad2d(b2, 1, H2_p)
    b3_p = b3                           # output is written unpadded

    # Batch tiling: one resident block for small B, 512-row tiles otherwise
    # (f32 x-tile 512 x In_p double-buffered + all weights stay far under the
    # 64 MiB v7x VMEM; bigger tiles amortize the ~0.35 us per-step overhead).
    TB = B if B <= 512 else 512
    grid = (pl.cdiv(B, TB),)

    flops = 2 * B * (In_p * H1_p + H1_p * H2_p + H2_p * Out_p)
    bytes_accessed = (
        x_p.size * 4
        + (w1_p.size + w2_p.size + w3_p.size) * 2
        + (b1_p.size + b2_p.size + b3_p.size) * 4
        + B * Out * 4)

    y = pl.pallas_call(
        _mlp3_kernel,
        out_shape=jax.ShapeDtypeStruct((B, Out), x2d.dtype),
        grid=grid,
        in_specs=[
            pl.BlockSpec((TB, In_p), lambda i: (i, 0)),      # x: tiled over batch
            pl.BlockSpec((In_p, H1_p), lambda i: (0, 0)),    # weights / biases stay
            pl.BlockSpec((1, H1_p), lambda i: (0, 0)),       # VMEM-resident across
            pl.BlockSpec((H1_p, H2_p), lambda i: (0, 0)),    # all grid steps
            pl.BlockSpec((1, H2_p), lambda i: (0, 0)),
            pl.BlockSpec((H2_p, Out_p), lambda i: (0, 0)),
            pl.BlockSpec((1, Out), lambda i: (0, 0)),
        ],
        out_specs=pl.BlockSpec((TB, Out), lambda i: (i, 0)),
        compiler_params=pltpu.CompilerParams(
            dimension_semantics=("parallel",),               # megacore-shardable
            vmem_limit_bytes=32 * 1024 * 1024,               # safe on v5e/v6e/v7x
        ),
        cost_estimate=pl.CostEstimate(
            flops=flops, transcendentals=0, bytes_accessed=bytes_accessed),
    )(x_p, w1_p, b1_p, w2_p, b2_p, w3_p, b3_p)

    return y


def init_sequential_params(key, in_features, hidden, out_features):
    """Deterministic PyTorch-style (uniform +-1/sqrt(fan_in)) Linear params."""
    dims = [in_features, hidden, hidden, out_features]
    params = []
    for i in range(len(dims) - 1):
        fan_in, fan_out = dims[i], dims[i + 1]
        key, kw, kb = jax.random.split(key, 3)
        bound = 1.0 / jnp.sqrt(jnp.asarray(fan_in, jnp.float32))
        w = jax.random.uniform(kw, (fan_in, fan_out), jnp.float32, -bound, bound)
        b = jax.random.uniform(kb, (1, fan_out), jnp.float32, -bound, bound)
        params.append((w, b))
    return params


@jax.jit
def sequential_forward(x_nchw, params):
    """Forward pass of the Sequential module.

    x_nchw: [B, C, H, W] -> Flatten -> Linear -> ReLU -> Linear -> ReLU -> Linear.
    The flatten is a zero-cost reshape (C*H*W is the trailing contiguous extent
    of the NCHW layout) fused by jit.
    """
    B = x_nchw.shape[0]
    x = x_nchw.reshape(B, -1)
    return fused_mlp3(x, params)


if __name__ == "__main__":
    key = jax.random.PRNGKey(0)
    kx, kp = jax.random.split(key)

    # small shapes consistent with the module: in_dim = (4, 16, 16)
    B, C, H, W = 2, 4, 16, 16
    hidden = 64
    out_features = 8

    x = jax.random.normal(kx, (B, C, H, W), dtype=jnp.float32)
    params = init_sequential_params(kp, C * H * W, hidden, out_features)

    y = sequential_forward(x, params)
    y = jax.block_until_ready(y)

    # Reference in plain JAX with the same bf16-operand / f32-accumulate math.
    xr = x.reshape(B, -1)
    n = len(params)
    for idx, (w, b) in enumerate(params):
        xr = jnp.dot(xr.astype(jnp.bfloat16), w.astype(jnp.bfloat16),
                     preferred_element_type=jnp.float32) + b
        if idx != n - 1:
            xr = jnp.maximum(xr, 0.0)

    assert y.shape == (B, out_features)
    assert jnp.allclose(y, xr, atol=1e-3, rtol=1e-3), float(jnp.max(jnp.abs(y - xr)))

    print("KERNEL_OK")
</pallas_src>

<mosaic_0001>
module attributes {stable_mosaic.version = 11 : i64} {
  func.func @_mlp3_kernel(%arg0: i32, %arg1: memref<2x1024xf32, #tpu.memory_space<vmem>>, %arg2: memref<1024x128xbf16, #tpu.memory_space<vmem>>, %arg3: memref<1x128xf32, #tpu.memory_space<vmem>>, %arg4: memref<128x128xbf16, #tpu.memory_space<vmem>>, %arg5: memref<1x128xf32, #tpu.memory_space<vmem>>, %arg6: memref<128x128xbf16, #tpu.memory_space<vmem>>, %arg7: memref<1x8xf32, #tpu.memory_space<vmem>>, %arg8: memref<2x8xf32, #tpu.memory_space<vmem>>) attributes {dimension_semantics = [#tpu.dimension_semantics<parallel>], iteration_bounds = array<i64: 1>, scalar_prefetch = 0 : i64, scratch_operands = 0 : i64, tpu.core_type = #tpu.core_type<tc>, window_params = [{transform_indices = @transform_0, window_bounds = array<i64: 2, 1024>}, {pipeline_mode = #tpu.pipeline_mode<synchronous>, transform_indices = @transform_1, window_bounds = array<i64: 1024, 128>}, {pipeline_mode = #tpu.pipeline_mode<synchronous>, transform_indices = @transform_2, window_bounds = array<i64: 1, 128>}, {pipeline_mode = #tpu.pipeline_mode<synchronous>, transform_indices = @transform_3, window_bounds = array<i64: 128, 128>}, {pipeline_mode = #tpu.pipeline_mode<synchronous>, transform_indices = @transform_4, window_bounds = array<i64: 1, 128>}, {pipeline_mode = #tpu.pipeline_mode<synchronous>, transform_indices = @transform_5, window_bounds = array<i64: 128, 128>}, {pipeline_mode = #tpu.pipeline_mode<synchronous>, transform_indices = @transform_6, window_bounds = array<i64: 1, 8>}, {transform_indices = @transform_7, window_bounds = array<i64: 2, 8>}]} {
    %c0 = arith.constant 0 : index
    %c0_0 = arith.constant 0 : index
    %0 = vector.load %arg1[%c0, %c0_0] : memref<2x1024xf32, #tpu.memory_space<vmem>>, vector<2x1024xf32>
    %1 = arith.truncf %0 : vector<2x1024xf32> to vector<2x1024xbf16>
    %c0_1 = arith.constant 0 : index
    %c0_2 = arith.constant 0 : index
    %2 = vector.load %arg2[%c0_1, %c0_2] : memref<1024x128xbf16, #tpu.memory_space<vmem>>, vector<1024x128xbf16>
    %cst = arith.constant dense<0.000000e+00> : vector<2x128xf32>
    %3 = tpu.matmul %1, %2, %cst {dimension_numbers = #tpu.dot_dimension_numbers<[1], [0], [0], [1], [0, 0, 1, 1], [], []>} : vector<2x1024xbf16>, vector<1024x128xbf16>, vector<2x128xf32> -> vector<2x128xf32>
    %c0_3 = arith.constant 0 : index
    %c0_4 = arith.constant 0 : index
    %4 = vector.load %arg3[%c0_3, %c0_4] : memref<1x128xf32, #tpu.memory_space<vmem>>, vector<1x128xf32>
    %5 = vector.broadcast %4 : vector<1x128xf32> to vector<2x128xf32>
    %6 = arith.addf %3, %5 : vector<2x128xf32>
    %cst_5 = arith.constant 0.000000e+00 : f32
    %7 = vector.broadcast %cst_5 : f32 to vector<2x128xf32>
    %8 = arith.maximumf %6, %7 : vector<2x128xf32>
    %9 = arith.truncf %8 : vector<2x128xf32> to vector<2x128xbf16>
    %c0_6 = arith.constant 0 : index
    %c0_7 = arith.constant 0 : index
    %10 = vector.load %arg4[%c0_6, %c0_7] : memref<128x128xbf16, #tpu.memory_space<vmem>>, vector<128x128xbf16>
    %cst_8 = arith.constant dense<0.000000e+00> : vector<2x128xf32>
    %11 = tpu.matmul %9, %10, %cst_8 {dimension_numbers = #tpu.dot_dimension_numbers<[1], [0], [0], [1], [0, 0, 1, 1], [], []>} : vector<2x128xbf16>, vector<128x128xbf16>, vector<2x128xf32> -> vector<2x128xf32>
    %c0_9 = arith.constant 0 : index
    %c0_10 = arith.constant 0 : index
    %12 = vector.load %arg5[%c0_9, %c0_10] : memref<1x128xf32, #tpu.memory_space<vmem>>, vector<1x128xf32>
    %13 = vector.broadcast %12 : vector<1x128xf32> to vector<2x128xf32>
    %14 = arith.addf %11, %13 : vector<2x128xf32>
    %cst_11 = arith.constant 0.000000e+00 : f32
    %15 = vector.broadcast %cst_11 : f32 to vector<2x128xf32>
    %16 = arith.maximumf %14, %15 : vector<2x128xf32>
    %17 = arith.truncf %16 : vector<2x128xf32> to vector<2x128xbf16>
    %c0_12 = arith.constant 0 : index
    %c0_13 = arith.constant 0 : index
    %18 = vector.load %arg6[%c0_12, %c0_13] : memref<128x128xbf16, #tpu.memory_space<vmem>>, vector<128x128xbf16>
    %cst_14 = arith.constant dense<0.000000e+00> : vector<2x128xf32>
    %19 = tpu.matmul %17, %18, %cst_14 {dimension_numbers = #tpu.dot_dimension_numbers<[1], [0], [0], [1], [0, 0, 1, 1], [], []>} : vector<2x128xbf16>, vector<128x128xbf16>, vector<2x128xf32> -> vector<2x128xf32>
    %20 = vector.extract_strided_slice %19 {offsets = [0, 0], sizes = [2, 8], strides = [1, 1]} : vector<2x128xf32> to vector<2x8xf32>
    %c0_15 = arith.constant 0 : index
    %c0_16 = arith.constant 0 : index
    %21 = vector.load %arg7[%c0_15, %c0_16] : memref<1x8xf32, #tpu.memory_space<vmem>>, vector<1x8xf32>
    %22 = vector.broadcast %21 : vector<1x8xf32> to vector<2x8xf32>
    %23 = arith.addf %20, %22 : vector<2x8xf32>
    %c0_17 = arith.constant 0 : index
    %c0_18 = arith.constant 0 : index
    %24 = vector.load %arg8[%c0_17, %c0_18] : memref<2x8xf32, #tpu.memory_space<vmem>>, vector<2x8xf32>
    tpu.vector_store %arg8[%c0_17, %c0_18], %23 {strides = array<i32>} : memref<2x8xf32, #tpu.memory_space<vmem>>, vector<2x8xf32>,
    return
  }
  func.func @transform_0(%arg0: i32) -> (i32, i32) {
    %c0_i32 = arith.constant 0 : i32
    %c0_i32_0 = arith.constant 0 : i32
    return %arg0, %c0_i32 : i32, i32
  }
  func.func @transform_1(%arg0: i32) -> (i32, i32) {
    %c0_i32 = arith.constant 0 : i32
    %c0_i32_0 = arith.constant 0 : i32
    %c0_i32_1 = arith.constant 0 : i32
    return %c0_i32, %c0_i32_0 : i32, i32
  }
  func.func @transform_2(%arg0: i32) -> (i32, i32) {
    %c0_i32 = arith.constant 0 : i32
    %c0_i32_0 = arith.constant 0 : i32
    %c0_i32_1 = arith.constant 0 : i32
    return %c0_i32, %c0_i32_0 : i32, i32
  }
  func.func @transform_3(%arg0: i32) -> (i32, i32) {
    %c0_i32 = arith.constant 0 : i32
    %c0_i32_0 = arith.constant 0 : i32
    %c0_i32_1 = arith.constant 0 : i32
    return %c0_i32, %c0_i32_0 : i32, i32
  }
  func.func @transform_4(%arg0: i32) -> (i32, i32) {
    %c0_i32 = arith.constant 0 : i32
    %c0_i32_0 = arith.constant 0 : i32
    %c0_i32_1 = arith.constant 0 : i32
    return %c0_i32, %c0_i32_0 : i32, i32
  }
  func.func @transform_5(%arg0: i32) -> (i32, i32) {
    %c0_i32 = arith.constant 0 : i32
    %c0_i32_0 = arith.constant 0 : i32
    %c0_i32_1 = arith.constant 0 : i32
    return %c0_i32, %c0_i32_0 : i32, i32
  }
  func.func @transform_6(%arg0: i32) -> (i32, i32) {
    %c0_i32 = arith.constant 0 : i32
    %c0_i32_0 = arith.constant 0 : i32
    %c0_i32_1 = arith.constant 0 : i32
    return %c0_i32, %c0_i32_0 : i32, i32
  }
  func.func @transform_7(%arg0: i32) -> (i32, i32) {
    %c0_i32 = arith.constant 0 : i32
    %c0_i32_0 = arith.constant 0 : i32
    return %arg0, %c0_i32 : i32, i32
  }
}

</mosaic_0001>

<llo_original>
// kernel: sequential_forward.1
$region0: #{sequential_forward.1}
  #allocation0 [shape = 'u32[]', space=smem, size = 0x4, offset = 0x4, fixed_abs, tag = 'smem constant byte address 0x4 - core index']
  #allocation1 [shape = 'u32[144,128]{1,0:T(1,128)}', space=vmem, size = 0x12000, scoped, tag = 'internal scratch']
  %s0 = inlined_call_operand.vmem [shape: f32[2,1024], index: 0, kind: input, shape index: {}]
  %s1 = inlined_call_operand.vmem [shape: bf16[1024,128], index: 1, kind: input, shape index: {}]
  %s2 = inlined_call_operand.vmem [shape: f32[1,128], index: 2, kind: input, shape index: {}]
  %s3 = inlined_call_operand.vmem [shape: bf16[128,128], index: 3, kind: input, shape index: {}]
  %s4 = inlined_call_operand.vmem [shape: f32[1,128], index: 4, kind: input, shape index: {}]
  %s5 = inlined_call_operand.vmem [shape: bf16[128,128], index: 5, kind: input, shape index: {}]
  %s6 = inlined_call_operand.vmem [shape: f32[1,8], index: 6, kind: input, shape index: {}]
  %s7 = inlined_call_operand.hbm [shape: f32[2,8], index: 7, kind: output, shape index: {}]
  %s8 = sld [smem:[#allocation0]]
  $region38: #{sequential_forward.1} parent=0
    _
  %s10 = ssub.s32 1, %s8
  %s11 = scalar_select 0, %s10, %s8
  $region1: #{sequential_forward.1} parent=0
    #allocation2 [shape = 'u8[1024]{0}', space=vmem, size = 0x400, scoped, tag = 'output window, operand 0, single buffered']
    #allocation3 [shape = 's32[1]{0}', space=sflag, size = 0x4, scoped, tag = 'scoped memory for sequential_forward.1']
    %12 = vsyncpa [#allocation3], 0
    // Predicated region
    $region2: #{sequential_forward.1} parent=1 // pred_check
      _
    $region3: #{sequential_forward.1} parent=1 // pred_check_branch
      %14 = sbr.rel (0) target = $region5
    $region4: #{sequential_forward.1} parent=1 // pred_region
      _
    $region5: #{sequential_forward.1} parent=1 // pred_fallthru
      _
    // Predicated region
    $region6: #{sequential_forward.1} parent=1 // pred_check
      _
    $region7: #{sequential_forward.1} parent=1 // pred_check_branch
      %16 = sbr.rel (0) target = $region9
    $region8: #{sequential_forward.1} parent=1 // pred_region
      _
    $region9: #{sequential_forward.1} parent=1 // pred_fallthru
      _
    // Predicated region
    $region10: #{sequential_forward.1} parent=1 // pred_check
      _
    $region11: #{sequential_forward.1} parent=1 // pred_check_branch
      %18 = sbr.rel (0) target = $region13
    $region12: #{sequential_forward.1} parent=1 // pred_region
      _
    $region13: #{sequential_forward.1} parent=1 // pred_fallthru
      _
    // Predicated region
    $region14: #{sequential_forward.1} parent=1 // pred_check
      _
    $region15: #{sequential_forward.1} parent=1 // pred_check_branch
      %20 = sbr.rel (0) target = $region17
    $region16: #{sequential_forward.1} parent=1 // pred_region
      _
    $region17: #{sequential_forward.1} parent=1 // pred_fallthru
      _
    // Predicated region
    $region18: #{sequential_forward.1} parent=1 // pred_check
      _
    $region19: #{sequential_forward.1} parent=1 // pred_check_branch
      %22 = sbr.rel (0) target = $region21
    $region20: #{sequential_forward.1} parent=1 // pred_region
      _
    $region21: #{sequential_forward.1} parent=1 // pred_fallthru
      _
    // Predicated region
    $region22: #{sequential_forward.1} parent=1 // pred_check
      _
    $region23: #{sequential_forward.1} parent=1 // pred_check_branch
      %24 = sbr.rel (0) target = $region25
    $region24: #{sequential_forward.1} parent=1 // pred_region
      _
    $region25: #{sequential_forward.1} parent=1 // pred_fallthru
      _
    // Predicated region
    $region26: #{sequential_forward.1} parent=1 // pred_check
      _
    $region27: #{sequential_forward.1} parent=1 // pred_check_branch
      %26 = sbr.rel (0) target = $region29
    $region28: #{sequential_forward.1} parent=1 // pred_region
      _
    $region29: #{sequential_forward.1} parent=1 // pred_fallthru
      _
    %v28 = vld [vmem:[%s0] sm:$0xff]
    %v29 = vld [vmem:[%s0 + $0x8] sm:$0xff]
    %v32 = vcombine.high %v28, %v28
    %v34 = vunpack.c.l.s4 1983009808
    %v35 = vunpack.c.0.s8 %v34
    %v36 = vlaneseq
    %v37 = vshrl.u32 %v36, 7
    %v38 = vsub.s32 %v35, %v37
    %v39 = vrot.slane %v28, %v38
    %v41 = vunpack.c.l.s4 1983009808
    %v42 = vunpack.c.0.s8 %v41
    %v43 = vlaneseq
    %v44 = vshrl.u32 %v43, 7
    %v45 = vsub.s32 %v42, %v44
    %v46 = vrot.slane %v32, %v45
    %v47 = vcombine.high %v39, %v39
    %v48 = vcombine.high %v46, %v46
    %v49 = vcombine.high %v29, %v29
    %v51 = vunpack.c.l.s4 1983009808
    %v52 = vunpack.c.0.s8 %v51
    %v53 = vlaneseq
    %v54 = vshrl.u32 %v53, 7
    %v55 = vsub.s32 %v52, %v54
    %v56 = vrot.slane %v29, %v55
    %v58 = vunpack.c.l.s4 1983009808
    %v59 = vunpack.c.0.s8 %v58
    %v60 = vlaneseq
    %v61 = vshrl.u32 %v60, 7
    %v62 = vsub.s32 %v59, %v61
    %v63 = vrot.slane %v49, %v62
    %v64 = vcombine.high %v56, %v56
    %v65 = vcombine.high %v63, %v63
    %v74 = vpack.c.bf16 %v39, %v39
    %v75 = vpack.c.bf16 %v47, %v47
    %v76 = vpack.c.bf16 %v46, %v46
    %v77 = vpack.c.bf16 %v48, %v48
    %v78 = vpack.c.bf16 %v56, %v56
    %v79 = vpack.c.bf16 %v64, %v64
    %v80 = vpack.c.bf16 %v63, %v63
    %v81 = vpack.c.bf16 %v65, %v65
    %v82 = vld [vmem:[%s1] sm:$0xf]
    %v83 = vld [vmem:[%s1 + $0x4] sm:$0xf]
    %v84 = vld [vmem:[%s1 + $0x8] sm:$0xf]
    %v85 = vld [vmem:[%s1 + $0xc] sm:$0xf]
    %v86 = vld [vmem:[%s1 + $0x10] sm:$0xf]
    %v87 = vld [vmem:[%s1 + $0x14] sm:$0xf]
    %v88 = vld [vmem:[%s1 + $0x18] sm:$0xf]
    %v89 = vld [vmem:[%s1 + $0x1c] sm:$0xf]
    %v90 = vld [vmem:[%s1 + $0x20] sm:$0xf]
    %v91 = vld [vmem:[%s1 + $0x24] sm:$0xf]
    %v92 = vld [vmem:[%s1 + $0x28] sm:$0xf]
    %v93 = vld [vmem:[%s1 + $0x2c] sm:$0xf]
    %v94 = vld [vmem:[%s1 + $0x30] sm:$0xf]
    %v95 = vld [vmem:[%s1 + $0x34] sm:$0xf]
    %v96 = vld [vmem:[%s1 + $0x38] sm:$0xf]
    %v97 = vld [vmem:[%s1 + $0x3c] sm:$0xf]
    %v98 = vld [vmem:[%s1 + $0x40] sm:$0xf]
    %v99 = vld [vmem:[%s1 + $0x44] sm:$0xf]
    %v100 = vld [vmem:[%s1 + $0x48] sm:$0xf]
    %v101 = vld [vmem:[%s1 + $0x4c] sm:$0xf]
    %v102 = vld [vmem:[%s1 + $0x50] sm:$0xf]
    %v103 = vld [vmem:[%s1 + $0x54] sm:$0xf]
    %v104 = vld [vmem:[%s1 + $0x58] sm:$0xf]
    %v105 = vld [vmem:[%s1 + $0x5c] sm:$0xf]
    %v106 = vld [vmem:[%s1 + $0x60] sm:$0xf]
    %v107 = vld [vmem:[%s1 + $0x64] sm:$0xf]
    %v108 = vld [vmem:[%s1 + $0x68] sm:$0xf]
    %v109 = vld [vmem:[%s1 + $0x6c] sm:$0xf]
    %v110 = vld [vmem:[%s1 + $0x70] sm:$0xf]
    %v111 = vld [vmem:[%s1 + $0x74] sm:$0xf]
    %v112 = vld [vmem:[%s1 + $0x78] sm:$0xf]
    %v113 = vld [vmem:[%s1 + $0x7c] sm:$0xf]
    %v114 = vld [vmem:[%s1 + $0x80] sm:$0xf]
    %v115 = vld [vmem:[%s1 + $0x84] sm:$0xf]
    %v116 = vld [vmem:[%s1 + $0x88] sm:$0xf]
    %v117 = vld [vmem:[%s1 + $0x8c] sm:$0xf]
    %v118 = vld [vmem:[%s1 + $0x90] sm:$0xf]
    %v119 = vld [vmem:[%s1 + $0x94] sm:$0xf]
    %v120 = vld [vmem:[%s1 + $0x98] sm:$0xf]
    %v121 = vld [vmem:[%s1 + $0x9c] sm:$0xf]
    %v122 = vld [vmem:[%s1 + $0xa0] sm:$0xf]
    %v123 = vld [vmem:[%s1 + $0xa4] sm:$0xf]
    %v124 = vld [vmem:[%s1 + $0xa8] sm:$0xf]
    %v125 = vld [vmem:[%s1 + $0xac] sm:$0xf]
    %v126 = vld [vmem:[%s1 + $0xb0] sm:$0xf]
    %v127 = vld [vmem:[%s1 + $0xb4] sm:$0xf]
    %v128 = vld [vmem:[%s1 + $0xb8] sm:$0xf]
    %v129 = vld [vmem:[%s1 + $0xbc] sm:$0xf]
    %v130 = vld [vmem:[%s1 + $0xc0] sm:$0xf]
    %v131 = vld [vmem:[%s1 + $0xc4] sm:$0xf]
    %v132 = vld [vmem:[%s1 + $0xc8] sm:$0xf]
    %v133 = vld [vmem:[%s1 + $0xcc] sm:$0xf]
    %v134 = vld [vmem:[%s1 + $0xd0] sm:$0xf]
    %v135 = vld [vmem:[%s1 + $0xd4] sm:$0xf]
    %v136 = vld [vmem:[%s1 + $0xd8] sm:$0xf]
    %v137 = vld [vmem:[%s1 + $0xdc] sm:$0xf]
    %v138 = vld [vmem:[%s1 + $0xe0] sm:$0xf]
    %v139 = vld [vmem:[%s1 + $0xe4] sm:$0xf]
    %v140 = vld [vmem:[%s1 + $0xe8] sm:$0xf]
    %v141 = vld [vmem:[%s1 + $0xec] sm:$0xf]
    %v142 = vld [vmem:[%s1 + $0xf0] sm:$0xf]
    %v143 = vld [vmem:[%s1 + $0xf4] sm:$0xf]
    %v144 = vld [vmem:[%s1 + $0xf8] sm:$0xf]
    %v145 = vld [vmem:[%s1 + $0xfc] sm:$0xf]
    %v146 = vld [vmem:[%s1 + $0x100] sm:$0xf]
    %v147 = vld [vmem:[%s1 + $0x104] sm:$0xf]
    %v148 = vld [vmem:[%s1 + $0x108] sm:$0xf]
    %v149 = vld [vmem:[%s1 + $0x10c] sm:$0xf]
    %v150 = vld [vmem:[%s1 + $0x110] sm:$0xf]
    %v151 = vld [vmem:[%s1 + $0x114] sm:$0xf]
    %v152 = vld [vmem:[%s1 + $0x118] sm:$0xf]
    %v153 = vld [vmem:[%s1 + $0x11c] sm:$0xf]
    %v154 = vld [vmem:[%s1 + $0x120] sm:$0xf]
    %v155 = vld [vmem:[%s1 + $0x124] sm:$0xf]
    %v156 = vld [vmem:[%s1 + $0x128] sm:$0xf]
    %v157 = vld [vmem:[%s1 + $0x12c] sm:$0xf]
    %v158 = vld [vmem:[%s1 + $0x130] sm:$0xf]
    %v159 = vld [vmem:[%s1 + $0x134] sm:$0xf]
    %v160 = vld [vmem:[%s1 + $0x138] sm:$0xf]
    %v161 = vld [vmem:[%s1 + $0x13c] sm:$0xf]
    %v162 = vld [vmem:[%s1 + $0x140] sm:$0xf]
    %v163 = vld [vmem:[%s1 + $0x144] sm:$0xf]
    %v164 = vld [vmem:[%s1 + $0x148] sm:$0xf]
    %v165 = vld [vmem:[%s1 + $0x14c] sm:$0xf]
    %v166 = vld [vmem:[%s1 + $0x150] sm:$0xf]
    %v167 = vld [vmem:[%s1 + $0x154] sm:$0xf]
    %v168 = vld [vmem:[%s1 + $0x158] sm:$0xf]
    %v169 = vld [vmem:[%s1 + $0x15c] sm:$0xf]
    %v170 = vld [vmem:[%s1 + $0x160] sm:$0xf]
    %v171 = vld [vmem:[%s1 + $0x164] sm:$0xf]
    %v172 = vld [vmem:[%s1 + $0x168] sm:$0xf]
    %v173 = vld [vmem:[%s1 + $0x16c] sm:$0xf]
    %v174 = vld [vmem:[%s1 + $0x170] sm:$0xf]
    %v175 = vld [vmem:[%s1 + $0x174] sm:$0xf]
    %v176 = vld [vmem:[%s1 + $0x178] sm:$0xf]
    %v177 = vld [vmem:[%s1 + $0x17c] sm:$0xf]
    %v178 = vld [vmem:[%s1 + $0x180] sm:$0xf]
    %v179 = vld [vmem:[%s1 + $0x184] sm:$0xf]
    %v180 = vld [vmem:[%s1 + $0x188] sm:$0xf]
    %v181 = vld [vmem:[%s1 + $0x18c] sm:$0xf]
    %v182 = vld [vmem:[%s1 + $0x190] sm:$0xf]
    %v183 = vld [vmem:[%s1 + $0x194] sm:$0xf]
    %v184 = vld [vmem:[%s1 + $0x198] sm:$0xf]
    %v185 = vld [vmem:[%s1 + $0x19c] sm:$0xf]
    %v186 = vld [vmem:[%s1 + $0x1a0] sm:$0xf]
    %v187 = vld [vmem:[%s1 + $0x1a4] sm:$0xf]
    %v188 = vld [vmem:[%s1 + $0x1a8] sm:$0xf]
    %v189 = vld [vmem:[%s1 + $0x1ac] sm:$0xf]
    %v190 = vld [vmem:[%s1 + $0x1b0] sm:$0xf]
    %v191 = vld [vmem:[%s1 + $0x1b4] sm:$0xf]
    %v192 = vld [vmem:[%s1 + $0x1b8] sm:$0xf]
    %v193 = vld [vmem:[%s1 + $0x1bc] sm:$0xf]
    %v194 = vld [vmem:[%s1 + $0x1c0] sm:$0xf]
    %v195 = vld [vmem:[%s1 + $0x1c4] sm:$0xf]
    %v196 = vld [vmem:[%s1 + $0x1c8] sm:$0xf]
    %v197 = vld [vmem:[%s1 + $0x1cc] sm:$0xf]
    %v198 = vld [vmem:[%s1 + $0x1d0] sm:$0xf]
    %v199 = vld [vmem:[%s1 + $0x1d4] sm:$0xf]
    %v200 = vld [vmem:[%s1 + $0x1d8] sm:$0xf]
    %v201 = vld [vmem:[%s1 + $0x1dc] sm:$0xf]
    %v202 = vld [vmem:[%s1 + $0x1e0] sm:$0xf]
    %v203 = vld [vmem:[%s1 + $0x1e4] sm:$0xf]
    %v204 = vld [vmem:[%s1 + $0x1e8] sm:$0xf]
    %v205 = vld [vmem:[%s1 + $0x1ec] sm:$0xf]
    %v206 = vld [vmem:[%s1 + $0x1f0] sm:$0xf]
    %v207 = vld [vmem:[%s1 + $0x1f4] sm:$0xf]
    %v208 = vld [vmem:[%s1 + $0x1f8] sm:$0xf]
    %v209 = vld [vmem:[%s1 + $0x1fc] sm:$0xf]
    %v210 = vld [vmem:[%s2] sm:$0x1]
    %v212 = vlaneseq
    %v213 = vshrl.u32 %v212, 7
    %v214 = vsub.s32 0, %v213
    %v215 = vrot.slane %v210, %v214
    %v345 = vunpack.c.l.b16 %v82
    %v346 = vunpack.c.l.b16 %v83
    %v347 = vunpack.c.l.b16 %v84
    %v348 = vunpack.c.l.b16 %v85
    %v349 = vunpack.c.l.b16 %v86
    %v350 = vunpack.c.l.b16 %v87
    %v351 = vunpack.c.l.b16 %v88
    %v352 = vunpack.c.l.b16 %v89
    %v353 = vunpack.c.l.b16 %v90
    %v354 = vunpack.c.l.b16 %v91
    %v355 = vunpack.c.l.b16 %v92
    %v356 = vunpack.c.l.b16 %v93
    %v357 = vunpack.c.l.b16 %v94
    %v358 = vunpack.c.l.b16 %v95
    %v359 = vunpack.c.l.b16 %v96
    %v360 = vunpack.c.l.b16 %v97
    %v361 = vunpack.c.l.b16 %v98
    %v362 = vunpack.c.l.b16 %v99
    %v363 = vunpack.c.l.b16 %v100
    %v364 = vunpack.c.l.b16 %v101
    %v365 = vunpack.c.l.b16 %v102
    %v366 = vunpack.c.l.b16 %v103
    %v367 = vunpack.c.l.b16 %v104
    %v368 = vunpack.c.l.b16 %v105
    %v369 = vunpack.c.l.b16 %v106
    %v370 = vunpack.c.l.b16 %v107
    %v371 = vunpack.c.l.b16 %v108
    %v372 = vunpack.c.l.b16 %v109
    %v373 = vunpack.c.l.b16 %v110
    %v374 = vunpack.c.l.b16 %v111
    %v375 = vunpack.c.l.b16 %v112
    %v376 = vunpack.c.l.b16 %v113
    %v377 = vunpack.c.l.b16 %v114
    %v378 = vunpack.c.l.b16 %v115
    %v379 = vunpack.c.l.b16 %v116
    %v380 = vunpack.c.l.b16 %v117
    %v381 = vunpack.c.l.b16 %v118
    %v382 = vunpack.c.l.b16 %v119
    %v383 = vunpack.c.l.b16 %v120
    %v384 = vunpack.c.l.b16 %v121
    %v385 = vunpack.c.l.b16 %v122
    %v386 = vunpack.c.l.b16 %v123
    %v387 = vunpack.c.l.b16 %v124
    %v388 = vunpack.c.l.b16 %v125
    %v389 = vunpack.c.l.b16 %v126
    %v390 = vunpack.c.l.b16 %v127
    %v391 = vunpack.c.l.b16 %v128
    %v392 = vunpack.c.l.b16 %v129
    %v393 = vunpack.c.l.b16 %v130
    %v394 = vunpack.c.l.b16 %v131
    %v395 = vunpack.c.l.b16 %v132
    %v396 = vunpack.c.l.b16 %v133
    %v397 = vunpack.c.l.b16 %v134
    %v398 = vunpack.c.l.b16 %v135
    %v399 = vunpack.c.l.b16 %v136
    %v400 = vunpack.c.l.b16 %v137
    %v401 = vunpack.c.l.b16 %v138
    %v402 = vunpack.c.l.b16 %v139
    %v403 = vunpack.c.l.b16 %v140
    %v404 = vunpack.c.l.b16 %v141
    %v405 = vunpack.c.l.b16 %v142
    %v406 = vunpack.c.l.b16 %v143
    %v407 = vunpack.c.l.b16 %v144
    %v408 = vunpack.c.l.b16 %v145
    %v409 = vunpack.c.l.b16 %v146
    %v410 = vunpack.c.l.b16 %v147
    %v411 = vunpack.c.l.b16 %v148
    %v412 = vunpack.c.l.b16 %v149
    %v413 = vunpack.c.l.b16 %v150
    %v414 = vunpack.c.l.b16 %v151
    %v415 = vunpack.c.l.b16 %v152
    %v416 = vunpack.c.l.b16 %v153
    %v417 = vunpack.c.l.b16 %v154
    %v418 = vunpack.c.l.b16 %v155
    %v419 = vunpack.c.l.b16 %v156
    %v420 = vunpack.c.l.b16 %v157
    %v421 = vunpack.c.l.b16 %v158
    %v422 = vunpack.c.l.b16 %v159
    %v423 = vunpack.c.l.b16 %v160
    %v424 = vunpack.c.l.b16 %v161
    %v425 = vunpack.c.l.b16 %v162
    %v426 = vunpack.c.l.b16 %v163
    %v427 = vunpack.c.l.b16 %v164
    %v428 = vunpack.c.l.b16 %v165
    %v429 = vunpack.c.l.b16 %v166
    %v430 = vunpack.c.l.b16 %v167
    %v431 = vunpack.c.l.b16 %v168
    %v432 = vunpack.c.l.b16 %v169
    %v433 = vunpack.c.l.b16 %v170
    %v434 = vunpack.c.l.b16 %v171
    %v435 = vunpack.c.l.b16 %v172
    %v436 = vunpack.c.l.b16 %v173
    %v437 = vunpack.c.l.b16 %v174
    %v438 = vunpack.c.l.b16 %v175
    %v439 = vunpack.c.l.b16 %v176
    %v440 = vunpack.c.l.b16 %v177
    %v441 = vunpack.c.l.b16 %v178
    %v442 = vunpack.c.l.b16 %v179
    %v443 = vunpack.c.l.b16 %v180
    %v444 = vunpack.c.l.b16 %v181
    %v445 = vunpack.c.l.b16 %v182
    %v446 = vunpack.c.l.b16 %v183
    %v447 = vunpack.c.l.b16 %v184
    %v448 = vunpack.c.l.b16 %v185
    %v449 = vunpack.c.l.b16 %v186
    %v450 = vunpack.c.l.b16 %v187
    %v451 = vunpack.c.l.b16 %v188
    %v452 = vunpack.c.l.b16 %v189
    %v453 = vunpack.c.l.b16 %v190
    %v454 = vunpack.c.l.b16 %v191
    %v455 = vunpack.c.l.b16 %v192
    %v456 = vunpack.c.l.b16 %v193
    %v457 = vunpack.c.l.b16 %v194
    %v458 = vunpack.c.l.b16 %v195
    %v459 = vunpack.c.l.b16 %v196
    %v460 = vunpack.c.l.b16 %v197
    %v461 = vunpack.c.l.b16 %v198
    %v462 = vunpack.c.l.b16 %v199
    %v463 = vunpack.c.l.b16 %v200
    %v464 = vunpack.c.l.b16 %v201
    %v465 = vunpack.c.l.b16 %v202
    %v466 = vunpack.c.l.b16 %v203
    %v467 = vunpack.c.l.b16 %v204
    %v468 = vunpack.c.l.b16 %v205
    %v469 = vunpack.c.l.b16 %v206
    %v470 = vunpack.c.l.b16 %v207
    %v471 = vunpack.c.l.b16 %v208
    %v472 = vunpack.c.l.b16 %v209
    %v473 = vpack.c.b16 %v346, %v345
    %v474 = vpack.c.b16 %v348, %v347
    %v475 = vpack.c.b16 %v350, %v349
    %v476 = vpack.c.b16 %v352, %v351
    %v477 = vpack.c.b16 %v354, %v353
    %v478 = vpack.c.b16 %v356, %v355
    %v479 = vpack.c.b16 %v358, %v357
    %v480 = vpack.c.b16 %v360, %v359
    %v481 = vpack.c.b16 %v362, %v361
    %v482 = vpack.c.b16 %v364, %v363
    %v483 = vpack.c.b16 %v366, %v365
    %v484 = vpack.c.b16 %v368, %v367
    %v485 = vpack.c.b16 %v370, %v369
    %v486 = vpack.c.b16 %v372, %v371
    %v487 = vpack.c.b16 %v374, %v373
    %v488 = vpack.c.b16 %v376, %v375
    %v489 = vpack.c.b16 %v378, %v377
    %v490 = vpack.c.b16 %v380, %v379
    %v491 = vpack.c.b16 %v382, %v381
    %v492 = vpack.c.b16 %v384, %v383
    %v493 = vpack.c.b16 %v386, %v385
    %v494 = vpack.c.b16 %v388, %v387
    %v495 = vpack.c.b16 %v390, %v389
    %v496 = vpack.c.b16 %v392, %v391
    %v497 = vpack.c.b16 %v394, %v393
    %v498 = vpack.c.b16 %v396, %v395
    %v499 = vpack.c.b16 %v398, %v397
    %v500 = vpack.c.b16 %v400, %v399
    %v501 = vpack.c.b16 %v402, %v401
    %v502 = vpack.c.b16 %v404, %v403
    %v503 = vpack.c.b16 %v406, %v405
    %v504 = vpack.c.b16 %v408, %v407
    %v505 = vpack.c.b16 %v410, %v409
    %v506 = vpack.c.b16 %v412, %v411
    %v507 = vpack.c.b16 %v414, %v413
    %v508 = vpack.c.b16 %v416, %v415
    %v509 = vpack.c.b16 %v418, %v417
    %v510 = vpack.c.b16 %v420, %v419
    %v511 = vpack.c.b16 %v422, %v421
    %v512 = vpack.c.b16 %v424, %v423
    %v513 = vpack.c.b16 %v426, %v425
    %v514 = vpack.c.b16 %v428, %v427
    %v515 = vpack.c.b16 %v430, %v429
    %v516 = vpack.c.b16 %v432, %v431
    %v517 = vpack.c.b16 %v434, %v433
    %v518 = vpack.c.b16 %v436, %v435
    %v519 = vpack.c.b16 %v438, %v437
    %v520 = vpack.c.b16 %v440, %v439
    %v521 = vpack.c.b16 %v442, %v441
    %v522 = vpack.c.b16 %v444, %v443
    %v523 = vpack.c.b16 %v446, %v445
    %v524 = vpack.c.b16 %v448, %v447
    %v525 = vpack.c.b16 %v450, %v449
    %v526 = vpack.c.b16 %v452, %v451
    %v527 = vpack.c.b16 %v454, %v453
    %v528 = vpack.c.b16 %v456, %v455
    %v529 = vpack.c.b16 %v458, %v457
    %v530 = vpack.c.b16 %v460, %v459
    %v531 = vpack.c.b16 %v462, %v461
    %v532 = vpack.c.b16 %v464, %v463
    %v533 = vpack.c.b16 %v466, %v465
    %v534 = vpack.c.b16 %v468, %v467
    %v535 = vpack.c.b16 %v470, %v469
    %v536 = vpack.c.b16 %v472, %v471
    %601 = vmatprep.subr.bf16.mxu0 0
    %602 = vmatpush1.bf16.msra.mxu0 %v473
    %603 = vmatprep.subr.bf16.mxu0 0
    %604 = vmatpush1.bf16.msra.mxu0 %v474
    %605 = vmatprep.subr.bf16.mxu0 0
    %606 = vmatpush1.bf16.msra.mxu0 %v475
    %607 = vmatprep.subr.bf16.mxu0 0
    %608 = vmatpush1.bf16.msra.mxu0 %v476
    %609 = vmatprep.subr.bf16.mxu0 0
    %610 = vmatpush1.bf16.msra.mxu0 %v477
    %611 = vmatprep.subr.bf16.mxu0 0
    %612 = vmatpush1.bf16.msra.mxu0 %v478
    %613 = vmatprep.subr.bf16.mxu0 0
    %614 = vmatpush1.bf16.msra.mxu0 %v479
    %615 = vmatprep.subr.bf16.mxu0 0
    %616 = vmatpush1.bf16.msra.mxu0 %v480
    %617 = vmatprep.subr.bf16.mxu0 0
    %618 = vmatpush1.bf16.msra.mxu0 %v481
    %619 = vmatprep.subr.bf16.mxu0 0
    %620 = vmatpush1.bf16.msra.mxu0 %v482
    %621 = vmatprep.subr.bf16.mxu0 0
    %622 = vmatpush1.bf16.msra.mxu0 %v483
    %623 = vmatprep.subr.bf16.mxu0 0
    %624 = vmatpush1.bf16.msra.mxu0 %v484
    %625 = vmatprep.subr.bf16.mxu0 0
    %626 = vmatpush1.bf16.msra.mxu0 %v485
    %627 = vmatprep.subr.bf16.mxu0 0
    %628 = vmatpush1.bf16.msra.mxu0 %v486
    %629 = vmatprep.subr.bf16.mxu0 0
    %630 = vmatpush1.bf16.msra.mxu0 %v487
    %631 = vmatprep.subr.bf16.mxu0 0
    %632 = vmatpush1.bf16.msra.mxu0 %v488
    %633 = vmatprep.mubr.bf16.mxu0 %v75
    %634 = vmatmul.mubr.bf16.gmra.mrb[0].mxu0 %v74
    %v635 = vpop.f32.mrb[0].mxu0
    %v636 = vadd.f32 %v215, %v635
    %v637 = vpop.f32.mrb[0].mxu0
    %v638 = vpop.f32.mrb[0].mxu0
    %v639 = vpop.f32.mrb[0].mxu0
    %640 = vdwg.mxu0
    %641 = vmatprep.subr.bf16.mxu0 0
    %642 = vmatpush1.bf16.msra.mxu0 %v489
    %643 = vmatprep.subr.bf16.mxu0 0
    %644 = vmatpush1.bf16.msra.mxu0 %v490
    %645 = vmatprep.subr.bf16.mxu0 0
    %646 = vmatpush1.bf16.msra.mxu0 %v491
    %647 = vmatprep.subr.bf16.mxu0 0
    %648 = vmatpush1.bf16.msra.mxu0 %v492
    %649 = vmatprep.subr.bf16.mxu0 0
    %650 = vmatpush1.bf16.msra.mxu0 %v493
    %651 = vmatprep.subr.bf16.mxu0 0
    %652 = vmatpush1.bf16.msra.mxu0 %v494
    %653 = vmatprep.subr.bf16.mxu0 0
    %654 = vmatpush1.bf16.msra.mxu0 %v495
    %655 = vmatprep.subr.bf16.mxu0 0
    %656 = vmatpush1.bf16.msra.mxu0 %v496
    %657 = vmatprep.subr.bf16.mxu0 0
    %658 = vmatpush1.bf16.msra.mxu0 %v497
    %659 = vmatprep.subr.bf16.mxu0 0
    %660 = vmatpush1.bf16.msra.mxu0 %v498
    %661 = vmatprep.subr.bf16.mxu0 0
    %662 = vmatpush1.bf16.msra.mxu0 %v499
    %663 = vmatprep.subr.bf16.mxu0 0
    %664 = vmatpush1.bf16.msra.mxu0 %v500
    %665 = vmatprep.subr.bf16.mxu0 0
    %666 = vmatpush1.bf16.msra.mxu0 %v501
    %667 = vmatprep.subr.bf16.mxu0 0
    %668 = vmatpush1.bf16.msra.mxu0 %v502
    %669 = vmatprep.subr.bf16.mxu0 0
    %670 = vmatpush1.bf16.msra.mxu0 %v503
    %671 = vmatprep.subr.bf16.mxu0 0
    %672 = vmatpush1.bf16.msra.mxu0 %v504
    %673 = vmatprep.mubr.bf16.mxu0 %v77
    %674 = vmatmul.mubr.bf16.gmra.mrb[0].mxu0 %v76
    %v675 = vpop.f32.mrb[0].mxu0
    %v676 = vadd.f32 %v636, %v675
    %v677 = vpop.f32.mrb[0].mxu0
    %v678 = vpop.f32.mrb[0].mxu0
    %v679 = vpop.f32.mrb[0].mxu0
    %680 = vdwg.mxu0
    %681 = vmatprep.subr.bf16.mxu0 0
    %682 = vmatpush1.bf16.msra.mxu0 %v505
    %683 = vmatprep.subr.bf16.mxu0 0
    %684 = vmatpush1.bf16.msra.mxu0 %v506
    %685 = vmatprep.subr.bf16.mxu0 0
    %686 = vmatpush1.bf16.msra.mxu0 %v507
    %687 = vmatprep.subr.bf16.mxu0 0
    %688 = vmatpush1.bf16.msra.mxu0 %v508
    %689 = vmatprep.subr.bf16.mxu0 0
    %690 = vmatpush1.bf16.msra.mxu0 %v509
    %691 = vmatprep.subr.bf16.mxu0 0
    %692 = vmatpush1.bf16.msra.mxu0 %v510
    %693 = vmatprep.subr.bf16.mxu0 0
    %694 = vmatpush1.bf16.msra.mxu0 %v511
    %695 = vmatprep.subr.bf16.mxu0 0
    %696 = vmatpush1.bf16.msra.mxu0 %v512
    %697 = vmatprep.subr.bf16.mxu0 0
    %698 = vmatpush1.bf16.msra.mxu0 %v513
    %699 = vmatprep.subr.bf16.mxu0 0
    %700 = vmatpush1.bf16.msra.mxu0 %v514
    %701 = vmatprep.subr.bf16.mxu0 0
    %702 = vmatpush1.bf16.msra.mxu0 %v515
    %703 = vmatprep.subr.bf16.mxu0 0
    %704 = vmatpush1.bf16.msra.mxu0 %v516
    %705 = vmatprep.subr.bf16.mxu0 0
    %706 = vmatpush1.bf16.msra.mxu0 %v517
    %707 = vmatprep.subr.bf16.mxu0 0
    %708 = vmatpush1.bf16.msra.mxu0 %v518
    %709 = vmatprep.subr.bf16.mxu0 0
    %710 = vmatpush1.bf16.msra.mxu0 %v519
    %711 = vmatprep.subr.bf16.mxu0 0
    %712 = vmatpush1.bf16.msra.mxu0 %v520
    %713 = vmatprep.mubr.bf16.mxu0 %v79
    %714 = vmatmul.mubr.bf16.gmra.mrb[0].mxu0 %v78
    %v715 = vpop.f32.mrb[0].mxu0
    %v716 = vadd.f32 %v676, %v715
    %v717 = vpop.f32.mrb[0].mxu0
    %v718 = vpop.f32.mrb[0].mxu0
    %v719 = vpop.f32.mrb[0].mxu0
    %720 = vdwg.mxu0
    %721 = vmatprep.subr.bf16.mxu0 0
    %722 = vmatpush1.bf16.msra.mxu0 %v521
    %723 = vmatprep.subr.bf16.mxu0 0
    %724 = vmatpush1.bf16.msra.mxu0 %v522
    %725 = vmatprep.subr.bf16.mxu0 0
    %726 = vmatpush1.bf16.msra.mxu0 %v523
    %727 = vmatprep.subr.bf16.mxu0 0
    %728 = vmatpush1.bf16.msra.mxu0 %v524
    %729 = vmatprep.subr.bf16.mxu0 0
    %730 = vmatpush1.bf16.msra.mxu0 %v525
    %731 = vmatprep.subr.bf16.mxu0 0
    %732 = vmatpush1.bf16.msra.mxu0 %v526
    %733 = vmatprep.subr.bf16.mxu0 0
    %734 = vmatpush1.bf16.msra.mxu0 %v527
    %735 = vmatprep.subr.bf16.mxu0 0
    %736 = vmatpush1.bf16.msra.mxu0 %v528
    %737 = vmatprep.subr.bf16.mxu0 0
    %738 = vmatpush1.bf16.msra.mxu0 %v529
    %739 = vmatprep.subr.bf16.mxu0 0
    %740 = vmatpush1.bf16.msra.mxu0 %v530
    %741 = vmatprep.subr.bf16.mxu0 0
    %742 = vmatpush1.bf16.msra.mxu0 %v531
    %743 = vmatprep.subr.bf16.mxu0 0
    %744 = vmatpush1.bf16.msra.mxu0 %v532
    %745 = vmatprep.subr.bf16.mxu0 0
    %746 = vmatpush1.bf16.msra.mxu0 %v533
    %747 = vmatprep.subr.bf16.mxu0 0
    %748 = vmatpush1.bf16.msra.mxu0 %v534
    %749 = vmatprep.subr.bf16.mxu0 0
    %750 = vmatpush1.bf16.msra.mxu0 %v535
    %751 = vmatprep.subr.bf16.mxu0 0
    %752 = vmatpush1.bf16.msra.mxu0 %v536
    %753 = vmatprep.mubr.bf16.mxu0 %v81
    %754 = vmatmul.mubr.bf16.gmra.mrb[0].mxu0 %v80
    %v755 = vpop.f32.mrb[0].mxu0
    %v756 = vadd.f32 %v716, %v755
    %v757 = vpop.f32.mrb[0].mxu0
    %v758 = vpop.f32.mrb[0].mxu0
    %v759 = vpop.f32.mrb[0].mxu0
    %760 = vdwg.mxu0
    %v761 = vmax.f32 %v756, 0.0
    %v762 = vpack.c.bf16 %v761, %v761
    %v763 = vld [vmem:[%s3] sm:$0xf]
    %v764 = vld [vmem:[%s3 + $0x4] sm:$0xf]
    %v765 = vld [vmem:[%s3 + $0x8] sm:$0xf]
    %v766 = vld [vmem:[%s3 + $0xc] sm:$0xf]
    %v767 = vld [vmem:[%s3 + $0x10] sm:$0xf]
    %v768 = vld [vmem:[%s3 + $0x14] sm:$0xf]
    %v769 = vld [vmem:[%s3 + $0x18] sm:$0xf]
    %v770 = vld [vmem:[%s3 + $0x1c] sm:$0xf]
    %v771 = vld [vmem:[%s3 + $0x20] sm:$0xf]
    %v772 = vld [vmem:[%s3 + $0x24] sm:$0xf]
    %v773 = vld [vmem:[%s3 + $0x28] sm:$0xf]
    %v774 = vld [vmem:[%s3 + $0x2c] sm:$0xf]
    %v775 = vld [vmem:[%s3 + $0x30] sm:$0xf]
    %v776 = vld [vmem:[%s3 + $0x34] sm:$0xf]
    %v777 = vld [vmem:[%s3 + $0x38] sm:$0xf]
    %v778 = vld [vmem:[%s3 + $0x3c] sm:$0xf]
    %v779 = vld [vmem:[%s4] sm:$0x1]
    %v781 = vlaneseq
    %v782 = vshrl.u32 %v781, 7
    %v783 = vsub.s32 0, %v782
    %v784 = vrot.slane %v779, %v783
    %v802 = vunpack.c.l.b16 %v763
    %v803 = vunpack.c.l.b16 %v764
    %v804 = vunpack.c.l.b16 %v765
    %v805 = vunpack.c.l.b16 %v766
    %v806 = vunpack.c.l.b16 %v767
    %v807 = vunpack.c.l.b16 %v768
    %v808 = vunpack.c.l.b16 %v769
    %v809 = vunpack.c.l.b16 %v770
    %v810 = vunpack.c.l.b16 %v771
    %v811 = vunpack.c.l.b16 %v772
    %v812 = vunpack.c.l.b16 %v773
    %v813 = vunpack.c.l.b16 %v774
    %v814 = vunpack.c.l.b16 %v775
    %v815 = vunpack.c.l.b16 %v776
    %v816 = vunpack.c.l.b16 %v777
    %v817 = vunpack.c.l.b16 %v778
    %v818 = vpack.c.b16 %v803, %v802
    %v819 = vpack.c.b16 %v805, %v804
    %v820 = vpack.c.b16 %v807, %v806
    %v821 = vpack.c.b16 %v809, %v808
    %v822 = vpack.c.b16 %v811, %v810
    %v823 = vpack.c.b16 %v813, %v812
    %v824 = vpack.c.b16 %v815, %v814
    %v825 = vpack.c.b16 %v817, %v816
    %834 = vmatprep.subr.bf16.mxu0 0
    %835 = vmatpush1.bf16.msra.mxu0 %v818
    %836 = vmatprep.subr.bf16.mxu0 0
    %837 = vmatpush1.bf16.msra.mxu0 %v819
    %838 = vmatprep.subr.bf16.mxu0 0
    %839 = vmatpush1.bf16.msra.mxu0 %v820
    %840 = vmatprep.subr.bf16.mxu0 0
    %841 = vmatpush1.bf16.msra.mxu0 %v821
    %842 = vmatprep.subr.bf16.mxu0 0
    %843 = vmatpush1.bf16.msra.mxu0 %v822
    %844 = vmatprep.subr.bf16.mxu0 0
    %845 = vmatpush1.bf16.msra.mxu0 %v823
    %846 = vmatprep.subr.bf16.mxu0 0
    %847 = vmatpush1.bf16.msra.mxu0 %v824
    %848 = vmatprep.subr.bf16.mxu0 0
    %849 = vmatpush1.bf16.msra.mxu0 %v825
    %850 = vmatprep.subr.bf16.mxu0 0
    %851 = vmatpush1.bf16.msra.mxu0 0
    %852 = vmatprep.subr.bf16.mxu0 0
    %853 = vmatpush1.bf16.msra.mxu0 0
    %854 = vmatprep.subr.bf16.mxu0 0
    %855 = vmatpush1.bf16.msra.mxu0 0
    %856 = vmatprep.subr.bf16.mxu0 0
    %857 = vmatpush1.bf16.msra.mxu0 0
    %858 = vmatprep.subr.bf16.mxu0 0
    %859 = vmatpush1.bf16.msra.mxu0 0
    %860 = vmatprep.subr.bf16.mxu0 0
    %861 = vmatpush1.bf16.msra.mxu0 0
    %862 = vmatprep.subr.bf16.mxu0 0
    %863 = vmatpush1.bf16.msra.mxu0 0
    %864 = vmatprep.subr.bf16.mxu0 0
    %865 = vmatpush1.bf16.msra.mxu0 0
    %866 = vmatprep.mubr.bf16.mxu0 0
    %867 = vmatmul.mubr.bf16.gmra.mrb[0].mxu0 %v762
    %v868 = vpop.f32.mrb[0].mxu0
    %v869 = vadd.f32 %v784, %v868
    %v870 = vpop.f32.mrb[0].mxu0
    %v871 = vpop.f32.mrb[0].mxu0
    %v872 = vpop.f32.mrb[0].mxu0
    %873 = vdwg.mxu0
    %v874 = vmax.f32 %v869, 0.0
    %v875 = vpack.c.bf16 %v874, %v874
    %v876 = vld [vmem:[%s5] sm:$0xf]
    %v877 = vld [vmem:[%s5 + $0x4] sm:$0xf]
    %v878 = vld [vmem:[%s5 + $0x8] sm:$0xf]
    %v879 = vld [vmem:[%s5 + $0xc] sm:$0xf]
    %v880 = vld [vmem:[%s5 + $0x10] sm:$0xf]
    %v881 = vld [vmem:[%s5 + $0x14] sm:$0xf]
    %v882 = vld [vmem:[%s5 + $0x18] sm:$0xf]
    %v883 = vld [vmem:[%s5 + $0x1c] sm:$0xf]
    %v884 = vld [vmem:[%s5 + $0x20] sm:$0xf]
    %v885 = vld [vmem:[%s5 + $0x24] sm:$0xf]
    %v886 = vld [vmem:[%s5 + $0x28] sm:$0xf]
    %v887 = vld [vmem:[%s5 + $0x2c] sm:$0xf]
    %v888 = vld [vmem:[%s5 + $0x30] sm:$0xf]
    %v889 = vld [vmem:[%s5 + $0x34] sm:$0xf]
    %v890 = vld [vmem:[%s5 + $0x38] sm:$0xf]
    %v891 = vld [vmem:[%s5 + $0x3c] sm:$0xf]
    %v908 = vunpack.c.l.b16 %v876
    %v909 = vunpack.c.l.b16 %v877
    %v910 = vunpack.c.l.b16 %v878
    %v911 = vunpack.c.l.b16 %v879
    %v912 = vunpack.c.l.b16 %v880
    %v913 = vunpack.c.l.b16 %v881
    %v914 = vunpack.c.l.b16 %v882
    %v915 = vunpack.c.l.b16 %v883
    %v916 = vunpack.c.l.b16 %v884
    %v917 = vunpack.c.l.b16 %v885
    %v918 = vunpack.c.l.b16 %v886
    %v919 = vunpack.c.l.b16 %v887
    %v920 = vunpack.c.l.b16 %v888
    %v921 = vunpack.c.l.b16 %v889
    %v922 = vunpack.c.l.b16 %v890
    %v923 = vunpack.c.l.b16 %v891
    %v924 = vpack.c.b16 %v909, %v908
    %v925 = vpack.c.b16 %v911, %v910
    %v926 = vpack.c.b16 %v913, %v912
    %v927 = vpack.c.b16 %v915, %v914
    %v928 = vpack.c.b16 %v917, %v916
    %v929 = vpack.c.b16 %v919, %v918
    %v930 = vpack.c.b16 %v921, %v920
    %v931 = vpack.c.b16 %v923, %v922
    %940 = vmatprep.subr.bf16.mxu0 0
    %941 = vmatpush1.bf16.msra.mxu0 %v924
    %942 = vmatprep.subr.bf16.mxu0 0
    %943 = vmatpush1.bf16.msra.mxu0 %v925
    %944 = vmatprep.subr.bf16.mxu0 0
    %945 = vmatpush1.bf16.msra.mxu0 %v926
    %946 = vmatprep.subr.bf16.mxu0 0
    %947 = vmatpush1.bf16.msra.mxu0 %v927
    %948 = vmatprep.subr.bf16.mxu0 0
    %949 = vmatpush1.bf16.msra.mxu0 %v928
    %950 = vmatprep.subr.bf16.mxu0 0
    %951 = vmatpush1.bf16.msra.mxu0 %v929
    %952 = vmatprep.subr.bf16.mxu0 0
    %953 = vmatpush1.bf16.msra.mxu0 %v930
    %954 = vmatprep.subr.bf16.mxu0 0
    %955 = vmatpush1.bf16.msra.mxu0 %v931
    %956 = vmatprep.subr.bf16.mxu0 0
    %957 = vmatpush1.bf16.msra.mxu0 0
    %958 = vmatprep.subr.bf16.mxu0 0
    %959 = vmatpush1.bf16.msra.mxu0 0
    %960 = vmatprep.subr.bf16.mxu0 0
    %961 = vmatpush1.bf16.msra.mxu0 0
    %962 = vmatprep.subr.bf16.mxu0 0
    %963 = vmatpush1.bf16.msra.mxu0 0
    %964 = vmatprep.subr.bf16.mxu0 0
    %965 = vmatpush1.bf16.msra.mxu0 0
    %966 = vmatprep.subr.bf16.mxu0 0
    %967 = vmatpush1.bf16.msra.mxu0 0
    %968 = vmatprep.subr.bf16.mxu0 0
    %969 = vmatpush1.bf16.msra.mxu0 0
    %970 = vmatprep.subr.bf16.mxu0 0
    %971 = vmatpush1.bf16.msra.mxu0 0
    %972 = vmatprep.mubr.bf16.mxu0 0
    %973 = vmatmul.mubr.bf16.gmra.mrb[0].mxu0 %v875
    %v974 = vpop.f32.mrb[0].mxu0
    %v975 = vadd.f32 0.0, %v974
    %v976 = vpop.f32.mrb[0].mxu0
    %v977 = vpop.f32.mrb[0].mxu0
    %v978 = vpop.f32.mrb[0].mxu0
    %979 = vdwg.mxu0
    %v980 = vld [vmem:[%s6] sm:$0x1]
    %v982 = vlaneseq
    %v983 = vshrl.u32 %v982, 7
    %v984 = vsub.s32 0, %v983
    %v985 = vrot.slane %v980, %v984
    %v987 = vadd.f32 %v975, %v985
    %vm988 = vcmask 58368
    %989 = vst.msk [vmem:[#allocation2] sm:$0x3] %vm988, %v987
    // Predicated region
    $region30: #{sequential_forward.1} parent=1 // pred_check
      _
    $region31: #{sequential_forward.1} parent=1 // pred_check_branch
      %991 = sbr.rel (0) target = $region33
    $region32: #{sequential_forward.1} parent=1 // pred_region
      %s993 = ssub.s32 32, 32
      %994 = vsyncadd [#allocation3], %s993
      %s996 = sshll.u32 [#allocation2], 4
      %s997 = int_to_ptr.vmem [resolvable:$true] %s996
      %999 = dma.vmem_to_hbm [thread:$0]  %s997, 32, %s7, [#allocation3]
    $region33: #{sequential_forward.1} parent=1 // pred_fallthru
      _
    // Predicated region
    $region34: #{sequential_forward.1} parent=1 // pred_check
      _
    $region35: #{sequential_forward.1} parent=1 // pred_check_branch
      %1001 = sbr.rel (0) target = $region37
    $region36: #{sequential_forward.1} parent=1 // pred_region
      %1002 = dma.done [#allocation3], 32
    $region37: #{sequential_forward.1} parent=1 // pred_fallthru
      _
    %1003 = vsyncpa [#allocation3], 1

</llo_original>
